<compile_context>
chip_gen: v7x
topology: tpu7x:2x2x1
jax: 0.10.0
libtpu: 0.0.40
codegen_flags: <defaults>
</compile_context>

<pallas_src>
import jax
import jax.numpy as jnp
from jax.experimental import pallas as pl
from jax.experimental.pallas import tpu as pltpu


def _round_up(x, m):
    return (x + m - 1) // m * m


def film_kernel(p_ref, w1_ref, b1_ref, w2_ref, b2_ref, out_ref):
    # p:   (32, Bn)  transposed im2col patches (27 real rows + zero pad), pixels on lanes
    # w1:  (32, 32)  conv3x3 weights (out-channels on sublanes, taps on lanes)
    # b1:  (32, 1)
    # w2:  (2C', 32) 1x1 conv weights
    # b2:  (2C', 1)
    # out: (2C', Bn) fused gamma/beta, channel-major, pixels on lanes
    h = jnp.dot(w1_ref[...], p_ref[...], preferred_element_type=jnp.float32)
    h = jnp.maximum(h + b1_ref[...], 0.0)                       # ReLU(conv3x3 + b1)
    out = jnp.dot(w2_ref[...], h, preferred_element_type=jnp.float32) + b2_ref[...]
    out_ref[...] = out.astype(out_ref.dtype)


def film_parameter_generator(ego_demand, w1, b1, w2, b2, target_channels):
    """ego_demand: (1, 3, H, W) NCHW.  Returns (gamma, beta), each (1, C', H, W)."""
    _, cin, H, W = ego_demand.shape
    cp = target_channels
    c2 = 2 * cp
    c1 = w1.shape[0]                 # 32
    N = H * W
    k_real = 9 * cin                 # 27
    k_pad = _round_up(k_real, 8)     # 32

    # ---- glue: channel-major spatial pad + transposed im2col (K, H*W) ----
    x = ego_demand[0]                                           # (3, H, W)
    xp = jnp.pad(x, ((0, 0), (1, 1), (1, 1)))                   # (3, H+2, W+2)
    taps = jnp.stack([xp[:, kh:kh + H, kw:kw + W]
                      for kh in range(3) for kw in range(3)], axis=0)  # (9, 3, H, W)
    patches = taps.reshape(k_real, N)                           # (27, H*W), pixels last

    # Pixel-axis tiling (lane axis): multiple of 128, padded with zero pixels.
    block_n = min(2048, _round_up(N, 128))
    n_pad = _round_up(N, block_n)
    patches = jnp.pad(patches, ((0, k_pad - k_real), (0, n_pad - N)))   # (32, n_pad)

    # PyTorch conv weights (OIHW) -> matmul layout matching tap row order (kh,kw,cin).
    w1m = jnp.transpose(w1, (0, 2, 3, 1)).reshape(c1, k_real)   # (32, 27)
    w1m = jnp.pad(w1m, ((0, 0), (0, k_pad - k_real)))           # (32, 32)
    w2m = w2.reshape(c2, c1)                                    # (2C', 32)

    out_flat = pl.pallas_call(
        film_kernel,
        out_shape=jax.ShapeDtypeStruct((c2, n_pad), jnp.float32),
        grid=(n_pad // block_n,),
        in_specs=[
            pl.BlockSpec((k_pad, block_n), lambda i: (0, i)),   # patches: tiled over pixels
            pl.BlockSpec((c1, k_pad), lambda i: (0, 0)),        # w1: resident
            pl.BlockSpec((c1, 1), lambda i: (0, 0)),            # b1: resident
            pl.BlockSpec((c2, c1), lambda i: (0, 0)),           # w2: resident
            pl.BlockSpec((c2, 1), lambda i: (0, 0)),            # b2: resident
        ],
        out_specs=pl.BlockSpec((c2, block_n), lambda i: (0, i)),
        compiler_params=pltpu.CompilerParams(
            dimension_semantics=("parallel",)),
    )(patches, w1m, b1.reshape(c1, 1), w2m, b2.reshape(c2, 1))

    # ---- glue: drop pixel padding, split gamma/beta, reshape to NCHW (no transpose) ----
    params = out_flat[:, :N].reshape(c2, H, W)
    gamma = params[:cp][None]                                   # (1, C', H, W)
    beta = params[cp:][None]                                    # (1, C', H, W)
    return gamma, beta


def reference(ego_demand, w1, b1, w2, b2, target_channels):
    dn = ("NCHW", "OIHW", "NCHW")
    y = jax.lax.conv_general_dilated(ego_demand, w1, (1, 1), "SAME",
                                     dimension_numbers=dn)
    y = jax.nn.relu(y + b1.reshape(1, -1, 1, 1))
    y = jax.lax.conv_general_dilated(y, w2, (1, 1), "SAME",
                                     dimension_numbers=dn)
    y = y + b2.reshape(1, -1, 1, 1)
    return y[:, :target_channels], y[:, target_channels:]


if __name__ == "__main__":
    target_channels = 8  # C'

    key = jax.random.PRNGKey(0)
    k_x, k_x2, k_w1, k_b1, k_w2, k_b2 = jax.random.split(key, 6)

    # Deterministic synthetic parameters (PyTorch Conv2d OIHW layout).
    w1 = jax.random.normal(k_w1, (32, 3, 3, 3), dtype=jnp.float32) * 0.1
    b1 = jax.random.normal(k_b1, (32,), dtype=jnp.float32) * 0.1
    w2 = jax.random.normal(k_w2, (2 * target_channels, 32, 1, 1), dtype=jnp.float32) * 0.1
    b2 = jax.random.normal(k_b2, (2 * target_channels,), dtype=jnp.float32) * 0.1

    fgen = jax.jit(film_parameter_generator, static_argnums=(5,))

    # Small case (single pixel block) and a slightly larger one that exercises
    # the multi-block grid + pixel-padding path.
    for kx, (H, W) in ((k_x, (16, 16)), (k_x2, (48, 48))):
        ego_demand = jax.random.normal(kx, (1, 3, H, W), dtype=jnp.float32)
        gamma, beta = fgen(ego_demand, w1, b1, w2, b2, target_channels)
        jax.block_until_ready((gamma, beta))

        g_ref, b_ref = reference(ego_demand, w1, b1, w2, b2, target_channels)
        assert gamma.shape == (1, target_channels, H, W)
        assert beta.shape == (1, target_channels, H, W)
        assert jnp.allclose(gamma, g_ref, atol=1e-4, rtol=1e-4)
        assert jnp.allclose(beta, b_ref, atol=1e-4, rtol=1e-4)

    print("KERNEL_OK")
</pallas_src>

<mosaic_0001>
module attributes {stable_mosaic.version = 11 : i64} {
  func.func @film_kernel(%arg0: i32, %arg1: memref<32x256xf32, #tpu.memory_space<vmem>>, %arg2: memref<32x32xf32, #tpu.memory_space<vmem>>, %arg3: memref<32x1xf32, #tpu.memory_space<vmem>>, %arg4: memref<16x32xf32, #tpu.memory_space<vmem>>, %arg5: memref<16x1xf32, #tpu.memory_space<vmem>>, %arg6: memref<16x256xf32, #tpu.memory_space<vmem>>) attributes {dimension_semantics = [#tpu.dimension_semantics<parallel>], iteration_bounds = array<i64: 1>, scalar_prefetch = 0 : i64, scratch_operands = 0 : i64, tpu.core_type = #tpu.core_type<tc>, window_params = [{transform_indices = @transform_0, window_bounds = array<i64: 32, 256>}, {pipeline_mode = #tpu.pipeline_mode<synchronous>, transform_indices = @transform_1, window_bounds = array<i64: 32, 32>}, {pipeline_mode = #tpu.pipeline_mode<synchronous>, transform_indices = @transform_2, window_bounds = array<i64: 32, 1>}, {pipeline_mode = #tpu.pipeline_mode<synchronous>, transform_indices = @transform_3, window_bounds = array<i64: 16, 32>}, {pipeline_mode = #tpu.pipeline_mode<synchronous>, transform_indices = @transform_4, window_bounds = array<i64: 16, 1>}, {transform_indices = @transform_5, window_bounds = array<i64: 16, 256>}]} {
    %c0 = arith.constant 0 : index
    %c0_0 = arith.constant 0 : index
    %0 = vector.load %arg2[%c0, %c0_0] : memref<32x32xf32, #tpu.memory_space<vmem>>, vector<32x32xf32>
    %c0_1 = arith.constant 0 : index
    %c0_2 = arith.constant 0 : index
    %1 = vector.load %arg1[%c0_1, %c0_2] : memref<32x256xf32, #tpu.memory_space<vmem>>, vector<32x256xf32>
    %cst = arith.constant dense<0.000000e+00> : vector<32x256xf32>
    %2 = tpu.matmul %0, %1, %cst {dimension_numbers = #tpu.dot_dimension_numbers<[1], [0], [0], [1], [0, 0, 1, 1], [], []>} : vector<32x32xf32>, vector<32x256xf32>, vector<32x256xf32> -> vector<32x256xf32>
    %c0_3 = arith.constant 0 : index
    %c0_4 = arith.constant 0 : index
    %3 = vector.load %arg3[%c0_3, %c0_4] : memref<32x1xf32, #tpu.memory_space<vmem>>, vector<32x1xf32>
    %4 = vector.broadcast %3 : vector<32x1xf32> to vector<32x256xf32>
    %5 = arith.addf %2, %4 : vector<32x256xf32>
    %cst_5 = arith.constant 0.000000e+00 : f32
    %6 = vector.broadcast %cst_5 : f32 to vector<32x256xf32>
    %7 = arith.maximumf %5, %6 : vector<32x256xf32>
    %c0_6 = arith.constant 0 : index
    %c0_7 = arith.constant 0 : index
    %8 = vector.load %arg4[%c0_6, %c0_7] : memref<16x32xf32, #tpu.memory_space<vmem>>, vector<16x32xf32>
    %cst_8 = arith.constant dense<0.000000e+00> : vector<16x256xf32>
    %9 = tpu.matmul %8, %7, %cst_8 {dimension_numbers = #tpu.dot_dimension_numbers<[1], [0], [0], [1], [0, 0, 1, 1], [], []>} : vector<16x32xf32>, vector<32x256xf32>, vector<16x256xf32> -> vector<16x256xf32>
    %c0_9 = arith.constant 0 : index
    %c0_10 = arith.constant 0 : index
    %10 = vector.load %arg5[%c0_9, %c0_10] : memref<16x1xf32, #tpu.memory_space<vmem>>, vector<16x1xf32>
    %11 = vector.broadcast %10 : vector<16x1xf32> to vector<16x256xf32>
    %12 = arith.addf %9, %11 : vector<16x256xf32>
    %c0_11 = arith.constant 0 : index
    %c0_12 = arith.constant 0 : index
    %13 = vector.load %arg6[%c0_11, %c0_12] : memref<16x256xf32, #tpu.memory_space<vmem>>, vector<16x256xf32>
    tpu.vector_store %arg6[%c0_11, %c0_12], %12 {strides = array<i32>} : memref<16x256xf32, #tpu.memory_space<vmem>>, vector<16x256xf32>,
    return
  }
  func.func @transform_0(%arg0: i32) -> (i32, i32) {
    %c0_i32 = arith.constant 0 : i32
    %c0_i32_0 = arith.constant 0 : i32
    return %c0_i32, %arg0 : i32, i32
  }
  func.func @transform_1(%arg0: i32) -> (i32, i32) {
    %c0_i32 = arith.constant 0 : i32
    %c0_i32_0 = arith.constant 0 : i32
    %c0_i32_1 = arith.constant 0 : i32
    return %c0_i32, %c0_i32_0 : i32, i32
  }
  func.func @transform_2(%arg0: i32) -> (i32, i32) {
    %c0_i32 = arith.constant 0 : i32
    %c0_i32_0 = arith.constant 0 : i32
    %c0_i32_1 = arith.constant 0 : i32
    return %c0_i32, %c0_i32_0 : i32, i32
  }
  func.func @transform_3(%arg0: i32) -> (i32, i32) {
    %c0_i32 = arith.constant 0 : i32
    %c0_i32_0 = arith.constant 0 : i32
    %c0_i32_1 = arith.constant 0 : i32
    return %c0_i32, %c0_i32_0 : i32, i32
  }
  func.func @transform_4(%arg0: i32) -> (i32, i32) {
    %c0_i32 = arith.constant 0 : i32
    %c0_i32_0 = arith.constant 0 : i32
    %c0_i32_1 = arith.constant 0 : i32
    return %c0_i32, %c0_i32_0 : i32, i32
  }
  func.func @transform_5(%arg0: i32) -> (i32, i32) {
    %c0_i32 = arith.constant 0 : i32
    %c0_i32_0 = arith.constant 0 : i32
    return %c0_i32, %arg0 : i32, i32
  }
}

</mosaic_0001>

<llo_original>
// kernel: film_parameter_generator.1
$region0: #{film_parameter_generator.1}
  #allocation0 [shape = 'u32[]', space=smem, size = 0x4, offset = 0x4, fixed_abs, tag = 'smem constant byte address 0x4 - core index']
  #allocation1 [shape = 'u32[144,128]{1,0:T(1,128)}', space=vmem, size = 0x12000, scoped, tag = 'internal scratch']
  %s0 = inlined_call_operand.vmem [shape: f32[32,256], index: 0, kind: input, shape index: {}]
  %s1 = inlined_call_operand.vmem [shape: f32[32,32], index: 1, kind: input, shape index: {}]
  %s2 = inlined_call_operand.vmem [shape: f32[32,1], index: 2, kind: input, shape index: {}]
  %s3 = inlined_call_operand.vmem [shape: f32[16,32], index: 3, kind: input, shape index: {}]
  %s4 = inlined_call_operand.vmem [shape: f32[16,1], index: 4, kind: input, shape index: {}]
  %s5 = inlined_call_operand.vmem [shape: f32[16,256], index: 5, kind: output, shape index: {}]
  %s6 = sld [smem:[#allocation0]]
  $region30: #{film_parameter_generator.1} parent=0
    _
  %s8 = ssub.s32 1, %s6
  %s9 = scalar_select 0, %s8, %s6
  // Predicated region
  $region2: #{film_parameter_generator.1} parent=0 // pred_check
    _
  $region3: #{film_parameter_generator.1} parent=0 // pred_check_branch
    %11 = sbr.rel (0) target = $region5
  $region4: #{film_parameter_generator.1} parent=0 // pred_region
    _
  $region5: #{film_parameter_generator.1} parent=0 // pred_fallthru
    _
  // Predicated region
  $region6: #{film_parameter_generator.1} parent=0 // pred_check
    _
  $region7: #{film_parameter_generator.1} parent=0 // pred_check_branch
    %13 = sbr.rel (0) target = $region9
  $region8: #{film_parameter_generator.1} parent=0 // pred_region
    _
  $region9: #{film_parameter_generator.1} parent=0 // pred_fallthru
    _
  // Predicated region
  $region10: #{film_parameter_generator.1} parent=0 // pred_check
    _
  $region11: #{film_parameter_generator.1} parent=0 // pred_check_branch
    %15 = sbr.rel (0) target = $region13
  $region12: #{film_parameter_generator.1} parent=0 // pred_region
    _
  $region13: #{film_parameter_generator.1} parent=0 // pred_fallthru
    _
  // Predicated region
  $region14: #{film_parameter_generator.1} parent=0 // pred_check
    _
  $region15: #{film_parameter_generator.1} parent=0 // pred_check_branch
    %17 = sbr.rel (0) target = $region17
  $region16: #{film_parameter_generator.1} parent=0 // pred_region
    _
  $region17: #{film_parameter_generator.1} parent=0 // pred_fallthru
    _
  // Predicated region
  $region18: #{film_parameter_generator.1} parent=0 // pred_check
    _
  $region19: #{film_parameter_generator.1} parent=0 // pred_check_branch
    %19 = sbr.rel (0) target = $region21
  $region20: #{film_parameter_generator.1} parent=0 // pred_region
    _
  $region21: #{film_parameter_generator.1} parent=0 // pred_fallthru
    _
  %v20 = vld [vmem:[%s1] sm:$0xff]
  %v21 = vld [vmem:[%s1 + $0x8] sm:$0xff]
  %v22 = vld [vmem:[%s1 + $0x10] sm:$0xff]
  %v23 = vld [vmem:[%s1 + $0x18] sm:$0xff]
  %v24 = vld [vmem:[%s0] sm:$0xff]
  %v25 = vld [vmem:[%s0 + $0x8] sm:$0xff]
  %v26 = vld [vmem:[%s0 + $0x10] sm:$0xff]
  %v27 = vld [vmem:[%s0 + $0x18] sm:$0xff]
  %v28 = vld [vmem:[%s0 + $0x20] sm:$0xff]
  %v29 = vld [vmem:[%s0 + $0x28] sm:$0xff]
  %v30 = vld [vmem:[%s0 + $0x30] sm:$0xff]
  %v31 = vld [vmem:[%s0 + $0x38] sm:$0xff]
  %v32 = vld [vmem:[%s2] sm:$0xff]
  %v33 = vld [vmem:[%s2 + $0x8] sm:$0xff]
  %v34 = vld [vmem:[%s2 + $0x10] sm:$0xff]
  %v35 = vld [vmem:[%s2 + $0x18] sm:$0xff]
  %37 = vset.pattern.permute.xlu0 0
  %38 = vperm.xlu0 %37, %v32
  %v39 = vpop.permute.xlu0 %38
  %42 = vset.pattern.permute.xlu0 0
  %43 = vperm.xlu0 %42, %v33
  %v44 = vpop.permute.xlu0 %43
  %47 = vset.pattern.permute.xlu0 0
  %48 = vperm.xlu0 %47, %v34
  %v49 = vpop.permute.xlu0 %48
  %52 = vset.pattern.permute.xlu0 0
  %53 = vperm.xlu0 %52, %v35
  %v54 = vpop.permute.xlu0 %53
  %vm56 = vcmask 261120
  %v58 = vsel %vm56, %v20, 0
  %v61 = vsel %vm56, %v21, 0
  %v64 = vsel %vm56, %v22, 0
  %v67 = vsel %vm56, %v23, 0
  %69 = vmatprep.subr.mxu0 %v25
  %70 = vmatpush1.msra.mxu0 %v24
  %71 = vmatprep.subr.mxu0 %v27
  %72 = vmatpush1.msra.mxu0 %v26
  %73 = vmatprep.subr.mxu0 %v29
  %74 = vmatpush1.msra.mxu0 %v28
  %75 = vmatprep.subr.mxu0 %v31
  %76 = vmatpush1.msra.mxu0 %v30
  %77 = vmatprep.subr.mxu0 0.0
  %78 = vmatpush1.msra.mxu0 0.0
  %79 = vmatprep.subr.mxu0 0.0
  %80 = vmatpush1.msra.mxu0 0.0
  %81 = vmatprep.subr.mxu0 0.0
  %82 = vmatpush1.msra.mxu0 0.0
  %83 = vmatprep.subr.mxu0 0.0
  %84 = vmatpush1.msra.mxu0 0.0
  %85 = vmatprep.subr.mxu0 0.0
  %86 = vmatpush1.msra.mxu0 0.0
  %87 = vmatprep.subr.mxu0 0.0
  %88 = vmatpush1.msra.mxu0 0.0
  %89 = vmatprep.subr.mxu0 0.0
  %90 = vmatpush1.msra.mxu0 0.0
  %91 = vmatprep.subr.mxu0 0.0
  %92 = vmatpush1.msra.mxu0 0.0
  %93 = vmatprep.subr.mxu0 0.0
  %94 = vmatpush1.msra.mxu0 0.0
  %95 = vmatprep.subr.mxu0 0.0
  %96 = vmatpush1.msra.mxu0 0.0
  %97 = vmatprep.subr.mxu0 0.0
  %98 = vmatpush1.msra.mxu0 0.0
  %99 = vmatprep.subr.mxu0 0.0
  %100 = vmatpush1.msra.mxu0 0.0
  %101 = vmatprep.subr.mxu0 0.0
  %102 = vmatpush1.msra.mxu0 0.0
  %103 = vmatprep.subr.mxu0 0.0
  %104 = vmatpush1.msra.mxu0 0.0
  %105 = vmatprep.subr.mxu0 0.0
  %106 = vmatpush1.msra.mxu0 0.0
  %107 = vmatprep.subr.mxu0 0.0
  %108 = vmatpush1.msra.mxu0 0.0
  %109 = vmatprep.subr.mxu0 0.0
  %110 = vmatpush1.msra.mxu0 0.0
  %111 = vmatprep.subr.mxu0 0.0
  %112 = vmatpush1.msra.mxu0 0.0
  %113 = vmatprep.subr.mxu0 0.0
  %114 = vmatpush1.msra.mxu0 0.0
  %115 = vmatprep.subr.mxu0 0.0
  %116 = vmatpush1.msra.mxu0 0.0
  %117 = vmatprep.subr.mxu0 0.0
  %118 = vmatpush1.msra.mxu0 0.0
  %119 = vmatprep.subr.mxu0 0.0
  %120 = vmatpush1.msra.mxu0 0.0
  %121 = vmatprep.subr.mxu0 0.0
  %122 = vmatpush1.msra.mxu0 0.0
  %123 = vmatprep.subr.mxu0 0.0
  %124 = vmatpush1.msra.mxu0 0.0
  %125 = vmatprep.subr.mxu0 0.0
  %126 = vmatpush1.msra.mxu0 0.0
  %127 = vmatprep.subr.mxu0 0.0
  %128 = vmatpush1.msra.mxu0 0.0
  %129 = vmatprep.subr.mxu0 0.0
  %130 = vmatpush1.msra.mxu0 0.0
  %131 = vmatprep.subr.mxu0 0.0
  %132 = vmatpush1.msra.mxu0 0.0
  %133 = vmatprep.mubr.f32.mxu0 0.0
  %134 = vmatmul.mubr.f32.gmra.mrb[0].mxu0 %v58
  %v135 = vpop.f32.mrb[0].mxu0
  %v136 = vadd.f32 %v39, %v135
  %v137 = vpop.f32.mrb[0].mxu0
  %v138 = vadd.f32 %v39, %v137
  %139 = vmatprep.mubr.f32.mxu0 0.0
  %140 = vmatmul.mubr.f32.gmra.mrb[0].mxu0 %v61
  %v141 = vpop.f32.mrb[0].mxu0
  %v142 = vadd.f32 %v44, %v141
  %v143 = vpop.f32.mrb[0].mxu0
  %v144 = vadd.f32 %v44, %v143
  %145 = vmatprep.mubr.f32.mxu0 0.0
  %146 = vmatmul.mubr.f32.gmra.mrb[0].mxu0 %v64
  %v147 = vpop.f32.mrb[0].mxu0
  %v148 = vadd.f32 %v49, %v147
  %v149 = vpop.f32.mrb[0].mxu0
  %v150 = vadd.f32 %v49, %v149
  %151 = vmatprep.mubr.f32.mxu0 0.0
  %152 = vmatmul.mubr.f32.gmra.mrb[0].mxu0 %v67
  %v153 = vpop.f32.mrb[0].mxu0
  %v154 = vadd.f32 %v54, %v153
  %v155 = vpop.f32.mrb[0].mxu0
  %v156 = vadd.f32 %v54, %v155
  %157 = vdwg.mxu0
  %v158 = vmax.f32 %v136, 0.0
  %v159 = vmax.f32 %v138, 0.0
  %v160 = vmax.f32 %v142, 0.0
  %v161 = vmax.f32 %v144, 0.0
  %v162 = vmax.f32 %v148, 0.0
  %v163 = vmax.f32 %v150, 0.0
  %v164 = vmax.f32 %v154, 0.0
  %v165 = vmax.f32 %v156, 0.0
  %v166 = vld [vmem:[%s3] sm:$0xff]
  %v167 = vld [vmem:[%s3 + $0x8] sm:$0xff]
  %v168 = vld [vmem:[%s4] sm:$0xff]
  %v169 = vld [vmem:[%s4 + $0x8] sm:$0xff]
  %171 = vset.pattern.permute.xlu0 0
  %172 = vperm.xlu0 %171, %v168
  %v173 = vpop.permute.xlu0 %172
  %176 = vset.pattern.permute.xlu0 0
  %177 = vperm.xlu0 %176, %v169
  %v178 = vpop.permute.xlu0 %177
  %v181 = vsel %vm56, %v166, 0
  %v184 = vsel %vm56, %v167, 0
  %186 = vmatprep.subr.mxu0 %v159
  %187 = vmatpush1.msra.mxu0 %v158
  %188 = vmatprep.subr.mxu0 %v161
  %189 = vmatpush1.msra.mxu0 %v160
  %190 = vmatprep.subr.mxu0 %v163
  %191 = vmatpush1.msra.mxu0 %v162
  %192 = vmatprep.subr.mxu0 %v165
  %193 = vmatpush1.msra.mxu0 %v164
  %194 = vmatprep.subr.mxu0 0.0
  %195 = vmatpush1.msra.mxu0 0.0
  %196 = vmatprep.subr.mxu0 0.0
  %197 = vmatpush1.msra.mxu0 0.0
  %198 = vmatprep.subr.mxu0 0.0
  %199 = vmatpush1.msra.mxu0 0.0
  %200 = vmatprep.subr.mxu0 0.0
  %201 = vmatpush1.msra.mxu0 0.0
  %202 = vmatprep.subr.mxu0 0.0
  %203 = vmatpush1.msra.mxu0 0.0
  %204 = vmatprep.subr.mxu0 0.0
  %205 = vmatpush1.msra.mxu0 0.0
  %206 = vmatprep.subr.mxu0 0.0
  %207 = vmatpush1.msra.mxu0 0.0
  %208 = vmatprep.subr.mxu0 0.0
  %209 = vmatpush1.msra.mxu0 0.0
  %210 = vmatprep.subr.mxu0 0.0
  %211 = vmatpush1.msra.mxu0 0.0
  %212 = vmatprep.subr.mxu0 0.0
  %213 = vmatpush1.msra.mxu0 0.0
  %214 = vmatprep.subr.mxu0 0.0
  %215 = vmatpush1.msra.mxu0 0.0
  %216 = vmatprep.subr.mxu0 0.0
  %217 = vmatpush1.msra.mxu0 0.0
  %218 = vmatprep.subr.mxu0 0.0
  %219 = vmatpush1.msra.mxu0 0.0
  %220 = vmatprep.subr.mxu0 0.0
  %221 = vmatpush1.msra.mxu0 0.0
  %222 = vmatprep.subr.mxu0 0.0
  %223 = vmatpush1.msra.mxu0 0.0
  %224 = vmatprep.subr.mxu0 0.0
  %225 = vmatpush1.msra.mxu0 0.0
  %226 = vmatprep.subr.mxu0 0.0
  %227 = vmatpush1.msra.mxu0 0.0
  %228 = vmatprep.subr.mxu0 0.0
  %229 = vmatpush1.msra.mxu0 0.0
  %230 = vmatprep.subr.mxu0 0.0
  %231 = vmatpush1.msra.mxu0 0.0
  %232 = vmatprep.subr.mxu0 0.0
  %233 = vmatpush1.msra.mxu0 0.0
  %234 = vmatprep.subr.mxu0 0.0
  %235 = vmatpush1.msra.mxu0 0.0
  %236 = vmatprep.subr.mxu0 0.0
  %237 = vmatpush1.msra.mxu0 0.0
  %238 = vmatprep.subr.mxu0 0.0
  %239 = vmatpush1.msra.mxu0 0.0
  %240 = vmatprep.subr.mxu0 0.0
  %241 = vmatpush1.msra.mxu0 0.0
  %242 = vmatprep.subr.mxu0 0.0
  %243 = vmatpush1.msra.mxu0 0.0
  %244 = vmatprep.subr.mxu0 0.0
  %245 = vmatpush1.msra.mxu0 0.0
  %246 = vmatprep.subr.mxu0 0.0
  %247 = vmatpush1.msra.mxu0 0.0
  %248 = vmatprep.subr.mxu0 0.0
  %249 = vmatpush1.msra.mxu0 0.0
  %250 = vmatprep.mubr.f32.mxu0 0.0
  %251 = vmatmul.mubr.f32.gmra.mrb[0].mxu0 %v181
  %v252 = vpop.f32.mrb[0].mxu0
  %v253 = vadd.f32 %v173, %v252
  %v254 = vpop.f32.mrb[0].mxu0
  %v255 = vadd.f32 %v173, %v254
  %256 = vmatprep.mubr.f32.mxu0 0.0
  %257 = vmatmul.mubr.f32.gmra.mrb[0].mxu0 %v184
  %v258 = vpop.f32.mrb[0].mxu0
  %v259 = vadd.f32 %v178, %v258
  %v260 = vpop.f32.mrb[0].mxu0
  %v261 = vadd.f32 %v178, %v260
  %262 = vdwg.mxu0
  %263 = vst [vmem:[%s5] sm:$0xff] %v253
  %264 = vst [vmem:[%s5 + $0x8] sm:$0xff] %v255
  %265 = vst [vmem:[%s5 + $0x10] sm:$0xff] %v259
  %266 = vst [vmem:[%s5 + $0x18] sm:$0xff] %v261
  // Predicated region
  $region22: #{film_parameter_generator.1} parent=0 // pred_check
    _
  $region23: #{film_parameter_generator.1} parent=0 // pred_check_branch
    %268 = sbr.rel (0) target = $region25
  $region24: #{film_parameter_generator.1} parent=0 // pred_region
    _
  $region25: #{film_parameter_generator.1} parent=0 // pred_fallthru
    _
  // Predicated region
  $region26: #{film_parameter_generator.1} parent=0 // pred_check
    _
  $region27: #{film_parameter_generator.1} parent=0 // pred_check_branch
    %270 = sbr.rel (0) target = $region29
  $region28: #{film_parameter_generator.1} parent=0 // pred_region
    _
  $region29: #{film_parameter_generator.1} parent=0 // pred_fallthru
    _

</llo_original>
